<compile_context>
chip_gen: v7x
topology: tpu7x:2x2x1
jax: 0.10.0
libtpu: 0.0.40
codegen_flags: <defaults>
</compile_context>

<pallas_src>
import jax
import jax.numpy as jnp
from jax.experimental import pallas as pl
from jax.experimental.pallas import tpu as pltpu

C_IN = 24 + 4 + 3          # 31
C1, C2, C3 = 32, 48, 64
BN_EPS = 1e-5


def _local_pointnet_kernel(x_ref, w1_ref, b1_ref, w2_ref, b2_ref,
                           w3_ref, b3_ref, wa_ref, ba_ref,
                           vec_ref, attn_ref):
    """One batch element: shared MLP + attention pooling, fully fused.

    x_ref   : (1, N, C_IN)       input points
    w*_ref  : (C_in_l, C_out_l)  BN-folded, pre-transposed conv weights
    b*_ref  : (1, C_out_l)       BN-folded biases
    wa_ref  : (1, C3)            attention Linear(64,1) weight (row vector)
    ba_ref  : (1, 1)             attention Linear bias
    vec_ref : (1, 1, C3)         attention-pooled feature vector
    attn_ref: (1, N, 1)          softmax attention weights
    """
    x = x_ref[0]                                                  # (N, C_IN)

    h = jnp.maximum(
        jnp.dot(x, w1_ref[...], preferred_element_type=jnp.float32)
        + b1_ref[...], 0.0)                                       # (N, C1)
    h = jnp.maximum(
        jnp.dot(h, w2_ref[...], preferred_element_type=jnp.float32)
        + b2_ref[...], 0.0)                                       # (N, C2)
    feat = jnp.maximum(
        jnp.dot(h, w3_ref[...], preferred_element_type=jnp.float32)
        + b3_ref[...], 0.0)                                       # (N, C3)

    # Attention logits: broadcast-mul + lane reduce instead of a 1-wide matmul.
    logits = (jnp.sum(feat * wa_ref[...], axis=-1, keepdims=True)
              + ba_ref[...])                                      # (N, 1)

    # Softmax over the point axis (sublane reduction).
    m = jnp.max(logits, axis=0, keepdims=True)
    e = jnp.exp(logits - m)                                       # (N, 1)
    w = e / jnp.sum(e, axis=0, keepdims=True)                     # (N, 1)

    vec_ref[0] = jnp.sum(feat * w, axis=0, keepdims=True)         # (1, C3)
    attn_ref[0] = w                                               # (N, 1)


@jax.jit
def local_pointnet_forward(x, fused_params):
    """x: (B, N, 31) -> (attn_vec (B, 64), attn_weights (B, N, 1))."""
    w1, b1, w2, b2, w3, b3, wa, ba = fused_params
    B, N, _ = x.shape

    def fixed(a):
        return pl.BlockSpec(a.shape, lambda i: (0,) * a.ndim)

    vec3, attn = pl.pallas_call(
        _local_pointnet_kernel,
        grid=(B,),
        in_specs=[
            pl.BlockSpec((1, N, C_IN), lambda i: (i, 0, 0)),
            fixed(w1), fixed(b1), fixed(w2), fixed(b2),
            fixed(w3), fixed(b3), fixed(wa), fixed(ba),
        ],
        out_specs=(
            pl.BlockSpec((1, 1, C3), lambda i: (i, 0, 0)),
            pl.BlockSpec((1, N, 1), lambda i: (i, 0, 0)),
        ),
        out_shape=(
            jax.ShapeDtypeStruct((B, 1, C3), jnp.float32),
            jax.ShapeDtypeStruct((B, N, 1), jnp.float32),
        ),
        compiler_params=pltpu.CompilerParams(
            dimension_semantics=("parallel",)),
    )(x, w1, b1, w2, b2, w3, b3, wa, ba)

    return vec3[:, 0, :], attn


def init_raw_params(key):
    """PyTorch-style Conv1d / BatchNorm1d / Linear parameters (eval-mode BN)."""
    def u(k, shape, bound):
        return jax.random.uniform(k, shape, jnp.float32, -bound, bound)

    layers = []
    c_in = C_IN
    for c_out in (C1, C2, C3):
        key, kw, kb, kg, kbeta, km, kv = jax.random.split(key, 7)
        bound = 1.0 / jnp.sqrt(jnp.float32(c_in))
        W = u(kw, (c_out, c_in), bound)            # Conv1d weight (k=1 squeezed)
        b = u(kb, (c_out,), bound)
        gamma = jax.random.uniform(kg, (c_out,), jnp.float32, 0.5, 1.5)
        beta = 0.1 * jax.random.normal(kbeta, (c_out,), jnp.float32)
        mean = 0.1 * jax.random.normal(km, (c_out,), jnp.float32)
        var = jax.random.uniform(kv, (c_out,), jnp.float32, 0.5, 1.5)
        layers.append((W, b, gamma, beta, mean, var))
        c_in = c_out

    key, kw, kb = jax.random.split(key, 3)
    bound = 1.0 / jnp.sqrt(jnp.float32(C3))
    Wa = u(kw, (1, C3), bound)                     # Linear(64, 1).weight
    ba = u(kb, (1,), bound)
    return layers, (Wa, ba)


def fuse_params(raw):
    """Fold eval-mode BatchNorm into the 1x1 convs; pre-transpose for x @ W.

    Done once, outside jit (per perf feedback: no transposes/adds inside the
    hot forward).
    """
    layers, (Wa, ba) = raw
    fused = []
    for (W, b, gamma, beta, mean, var) in layers:
        scale = gamma / jnp.sqrt(var + BN_EPS)             # (C_out,)
        Wf = (W * scale[:, None]).T                        # (C_in, C_out)
        bf = (scale * (b - mean) + beta).reshape(1, -1)    # (1, C_out)
        fused += [Wf, bf]
    fused += [Wa.reshape(1, C3), ba.reshape(1, 1)]
    return tuple(jnp.asarray(p) for p in fused)


def local_pointnet_ref(x, raw):
    """Pure-JAX replica of the PyTorch forward (eval-mode BatchNorm)."""
    layers, (Wa, ba) = raw
    h = x
    for (W, b, gamma, beta, mean, var) in layers:
        h = h @ W.T + b
        h = (h - mean) / jnp.sqrt(var + BN_EPS) * gamma + beta
        h = jnp.maximum(h, 0.0)
    logits = h @ Wa.T + ba                         # (B, N, 1)
    w = jax.nn.softmax(logits, axis=1)
    vec = jnp.sum(h * w, axis=1)                   # (B, 64)
    return vec, w


if __name__ == "__main__":
    key = jax.random.PRNGKey(0)
    k_param, k_x = jax.random.split(key)

    B, N = 2, 16
    raw = init_raw_params(k_param)
    fused = fuse_params(raw)

    x = jax.random.normal(k_x, (B, N, C_IN), jnp.float32)

    vec, attn = local_pointnet_forward(x, fused)
    jax.block_until_ready((vec, attn))

    vec_ref, attn_w_ref = local_pointnet_ref(x, raw)

    assert vec.shape == (B, C3)
    assert attn.shape == (B, N, 1)
    assert jnp.allclose(jnp.sum(attn, axis=1), 1.0, atol=1e-4)
    assert jnp.allclose(vec, vec_ref, rtol=2e-2, atol=2e-2)
    assert jnp.allclose(attn, attn_w_ref, rtol=2e-2, atol=2e-2)
    print("KERNEL_OK")
</pallas_src>

<mosaic_0001>
module attributes {stable_mosaic.version = 11 : i64} {
  func.func @_local_pointnet_kernel(%arg0: i32, %arg1: memref<1x16x31xf32, #tpu.memory_space<vmem>>, %arg2: memref<31x32xf32, #tpu.memory_space<vmem>>, %arg3: memref<1x32xf32, #tpu.memory_space<vmem>>, %arg4: memref<32x48xf32, #tpu.memory_space<vmem>>, %arg5: memref<1x48xf32, #tpu.memory_space<vmem>>, %arg6: memref<48x64xf32, #tpu.memory_space<vmem>>, %arg7: memref<1x64xf32, #tpu.memory_space<vmem>>, %arg8: memref<1x64xf32, #tpu.memory_space<vmem>>, %arg9: memref<1x1xf32, #tpu.memory_space<vmem>>, %arg10: memref<1x1x64xf32, #tpu.memory_space<vmem>>, %arg11: memref<1x16x1xf32, #tpu.memory_space<vmem>>) attributes {dimension_semantics = [#tpu.dimension_semantics<parallel>], iteration_bounds = array<i64: 2>, scalar_prefetch = 0 : i64, scratch_operands = 0 : i64, tpu.core_type = #tpu.core_type<tc>, window_params = [{transform_indices = @transform_0, window_bounds = array<i64: 1, 16, 31>}, {pipeline_mode = #tpu.pipeline_mode<synchronous>, transform_indices = @transform_1, window_bounds = array<i64: 31, 32>}, {pipeline_mode = #tpu.pipeline_mode<synchronous>, transform_indices = @transform_2, window_bounds = array<i64: 1, 32>}, {pipeline_mode = #tpu.pipeline_mode<synchronous>, transform_indices = @transform_3, window_bounds = array<i64: 32, 48>}, {pipeline_mode = #tpu.pipeline_mode<synchronous>, transform_indices = @transform_4, window_bounds = array<i64: 1, 48>}, {pipeline_mode = #tpu.pipeline_mode<synchronous>, transform_indices = @transform_5, window_bounds = array<i64: 48, 64>}, {pipeline_mode = #tpu.pipeline_mode<synchronous>, transform_indices = @transform_6, window_bounds = array<i64: 1, 64>}, {pipeline_mode = #tpu.pipeline_mode<synchronous>, transform_indices = @transform_7, window_bounds = array<i64: 1, 64>}, {pipeline_mode = #tpu.pipeline_mode<synchronous>, transform_indices = @transform_8, window_bounds = array<i64: 1, 1>}, {transform_indices = @transform_9, window_bounds = array<i64: 1, 1, 64>}, {transform_indices = @transform_10, window_bounds = array<i64: 1, 16, 1>}]} {
    %c0 = arith.constant 0 : index
    %c0_0 = arith.constant 0 : index
    %c0_1 = arith.constant 0 : index
    %0 = vector.load %arg1[%c0, %c0_0, %c0_1] : memref<1x16x31xf32, #tpu.memory_space<vmem>>, vector<1x16x31xf32>
    %1 = vector.shape_cast %0 : vector<1x16x31xf32> to vector<16x31xf32>
    %c0_2 = arith.constant 0 : index
    %c0_3 = arith.constant 0 : index
    %2 = vector.load %arg2[%c0_2, %c0_3] : memref<31x32xf32, #tpu.memory_space<vmem>>, vector<31x32xf32>
    %cst = arith.constant dense<0.000000e+00> : vector<16x32xf32>
    %3 = tpu.matmul %1, %2, %cst {dimension_numbers = #tpu.dot_dimension_numbers<[1], [0], [0], [1], [0, 0, 1, 1], [], []>} : vector<16x31xf32>, vector<31x32xf32>, vector<16x32xf32> -> vector<16x32xf32>
    %c0_4 = arith.constant 0 : index
    %c0_5 = arith.constant 0 : index
    %4 = vector.load %arg3[%c0_4, %c0_5] : memref<1x32xf32, #tpu.memory_space<vmem>>, vector<1x32xf32>
    %5 = vector.broadcast %4 : vector<1x32xf32> to vector<16x32xf32>
    %6 = arith.addf %3, %5 : vector<16x32xf32>
    %cst_6 = arith.constant 0.000000e+00 : f32
    %7 = vector.broadcast %cst_6 : f32 to vector<16x32xf32>
    %8 = arith.maximumf %6, %7 : vector<16x32xf32>
    %c0_7 = arith.constant 0 : index
    %c0_8 = arith.constant 0 : index
    %9 = vector.load %arg4[%c0_7, %c0_8] : memref<32x48xf32, #tpu.memory_space<vmem>>, vector<32x48xf32>
    %cst_9 = arith.constant dense<0.000000e+00> : vector<16x48xf32>
    %10 = tpu.matmul %8, %9, %cst_9 {dimension_numbers = #tpu.dot_dimension_numbers<[1], [0], [0], [1], [0, 0, 1, 1], [], []>} : vector<16x32xf32>, vector<32x48xf32>, vector<16x48xf32> -> vector<16x48xf32>
    %c0_10 = arith.constant 0 : index
    %c0_11 = arith.constant 0 : index
    %11 = vector.load %arg5[%c0_10, %c0_11] : memref<1x48xf32, #tpu.memory_space<vmem>>, vector<1x48xf32>
    %12 = vector.broadcast %11 : vector<1x48xf32> to vector<16x48xf32>
    %13 = arith.addf %10, %12 : vector<16x48xf32>
    %cst_12 = arith.constant 0.000000e+00 : f32
    %14 = vector.broadcast %cst_12 : f32 to vector<16x48xf32>
    %15 = arith.maximumf %13, %14 : vector<16x48xf32>
    %c0_13 = arith.constant 0 : index
    %c0_14 = arith.constant 0 : index
    %16 = vector.load %arg6[%c0_13, %c0_14] : memref<48x64xf32, #tpu.memory_space<vmem>>, vector<48x64xf32>
    %cst_15 = arith.constant dense<0.000000e+00> : vector<16x64xf32>
    %17 = tpu.matmul %15, %16, %cst_15 {dimension_numbers = #tpu.dot_dimension_numbers<[1], [0], [0], [1], [0, 0, 1, 1], [], []>} : vector<16x48xf32>, vector<48x64xf32>, vector<16x64xf32> -> vector<16x64xf32>
    %c0_16 = arith.constant 0 : index
    %c0_17 = arith.constant 0 : index
    %18 = vector.load %arg7[%c0_16, %c0_17] : memref<1x64xf32, #tpu.memory_space<vmem>>, vector<1x64xf32>
    %19 = vector.broadcast %18 : vector<1x64xf32> to vector<16x64xf32>
    %20 = arith.addf %17, %19 : vector<16x64xf32>
    %cst_18 = arith.constant 0.000000e+00 : f32
    %21 = vector.broadcast %cst_18 : f32 to vector<16x64xf32>
    %22 = arith.maximumf %20, %21 : vector<16x64xf32>
    %c0_19 = arith.constant 0 : index
    %c0_20 = arith.constant 0 : index
    %23 = vector.load %arg8[%c0_19, %c0_20] : memref<1x64xf32, #tpu.memory_space<vmem>>, vector<1x64xf32>
    %24 = vector.broadcast %23 : vector<1x64xf32> to vector<16x64xf32>
    %25 = arith.mulf %22, %24 : vector<16x64xf32>
    %cst_21 = arith.constant dense<0.000000e+00> : vector<16xf32>
    %26 = vector.multi_reduction <add>, %25, %cst_21 [1] : vector<16x64xf32> to vector<16xf32>
    %27 = vector.shape_cast %26 : vector<16xf32> to vector<16x1xf32>
    %c0_22 = arith.constant 0 : index
    %c0_23 = arith.constant 0 : index
    %28 = vector.load %arg9[%c0_22, %c0_23] : memref<1x1xf32, #tpu.memory_space<vmem>>, vector<1x1xf32>
    %29 = vector.broadcast %28 : vector<1x1xf32> to vector<16x1xf32>
    %30 = arith.addf %27, %29 : vector<16x1xf32>
    %cst_24 = arith.constant dense<0xFF800000> : vector<1xf32>
    %31 = vector.multi_reduction <maximumf>, %30, %cst_24 [0] : vector<16x1xf32> to vector<1xf32>
    %32 = vector.shape_cast %31 : vector<1xf32> to vector<1x1xf32>
    %33 = vector.broadcast %32 : vector<1x1xf32> to vector<16x1xf32>
    %34 = arith.subf %30, %33 : vector<16x1xf32>
    %35 = math.exp %34 : vector<16x1xf32>
    %cst_25 = arith.constant dense<0.000000e+00> : vector<1xf32>
    %36 = vector.multi_reduction <add>, %35, %cst_25 [0] : vector<16x1xf32> to vector<1xf32>
    %37 = vector.shape_cast %36 : vector<1xf32> to vector<1x1xf32>
    %38 = vector.broadcast %37 : vector<1x1xf32> to vector<16x1xf32>
    %39 = arith.divf %35, %38 : vector<16x1xf32>
    %40 = vector.broadcast %39 : vector<16x1xf32> to vector<16x64xf32>
    %41 = arith.mulf %22, %40 : vector<16x64xf32>
    %cst_26 = arith.constant dense<0.000000e+00> : vector<64xf32>
    %42 = vector.multi_reduction <add>, %41, %cst_26 [0] : vector<16x64xf32> to vector<64xf32>
    %43 = vector.shape_cast %42 : vector<64xf32> to vector<1x64xf32>
    %c0_27 = arith.constant 0 : index
    %c0_28 = arith.constant 0 : index
    %c0_29 = arith.constant 0 : index
    %44 = vector.load %arg10[%c0_27, %c0_28, %c0_29] : memref<1x1x64xf32, #tpu.memory_space<vmem>>, vector<1x1x64xf32>
    %45 = vector.shape_cast %44 : vector<1x1x64xf32> to vector<1x64xf32>
    %46 = vector.shape_cast %43 : vector<1x64xf32> to vector<1x1x64xf32>
    tpu.vector_store %arg10[%c0_27, %c0_28, %c0_29], %46 {strides = array<i32>} : memref<1x1x64xf32, #tpu.memory_space<vmem>>, vector<1x1x64xf32>,
    %c0_30 = arith.constant 0 : index
    %c0_31 = arith.constant 0 : index
    %c0_32 = arith.constant 0 : index
    %47 = vector.load %arg11[%c0_30, %c0_31, %c0_32] : memref<1x16x1xf32, #tpu.memory_space<vmem>>, vector<1x16x1xf32>
    %48 = vector.shape_cast %47 : vector<1x16x1xf32> to vector<16x1xf32>
    %49 = vector.shape_cast %39 : vector<16x1xf32> to vector<1x16x1xf32>
    tpu.vector_store %arg11[%c0_30, %c0_31, %c0_32], %49 {strides = array<i32>} : memref<1x16x1xf32, #tpu.memory_space<vmem>>, vector<1x16x1xf32>,
    return
  }
  func.func @transform_0(%arg0: i32) -> (i32, i32, i32) {
    %c0_i32 = arith.constant 0 : i32
    %c0_i32_0 = arith.constant 0 : i32
    %c0_i32_1 = arith.constant 0 : i32
    return %arg0, %c0_i32, %c0_i32_0 : i32, i32, i32
  }
  func.func @transform_1(%arg0: i32) -> (i32, i32) {
    %c0_i32 = arith.constant 0 : i32
    %c0_i32_0 = arith.constant 0 : i32
    %c0_i32_1 = arith.constant 0 : i32
    return %c0_i32, %c0_i32_0 : i32, i32
  }
  func.func @transform_2(%arg0: i32) -> (i32, i32) {
    %c0_i32 = arith.constant 0 : i32
    %c0_i32_0 = arith.constant 0 : i32
    %c0_i32_1 = arith.constant 0 : i32
    return %c0_i32, %c0_i32_0 : i32, i32
  }
  func.func @transform_3(%arg0: i32) -> (i32, i32) {
    %c0_i32 = arith.constant 0 : i32
    %c0_i32_0 = arith.constant 0 : i32
    %c0_i32_1 = arith.constant 0 : i32
    return %c0_i32, %c0_i32_0 : i32, i32
  }
  func.func @transform_4(%arg0: i32) -> (i32, i32) {
    %c0_i32 = arith.constant 0 : i32
    %c0_i32_0 = arith.constant 0 : i32
    %c0_i32_1 = arith.constant 0 : i32
    return %c0_i32, %c0_i32_0 : i32, i32
  }
  func.func @transform_5(%arg0: i32) -> (i32, i32) {
    %c0_i32 = arith.constant 0 : i32
    %c0_i32_0 = arith.constant 0 : i32
    %c0_i32_1 = arith.constant 0 : i32
    return %c0_i32, %c0_i32_0 : i32, i32
  }
  func.func @transform_6(%arg0: i32) -> (i32, i32) {
    %c0_i32 = arith.constant 0 : i32
    %c0_i32_0 = arith.constant 0 : i32
    %c0_i32_1 = arith.constant 0 : i32
    return %c0_i32, %c0_i32_0 : i32, i32
  }
  func.func @transform_7(%arg0: i32) -> (i32, i32) {
    %c0_i32 = arith.constant 0 : i32
    %c0_i32_0 = arith.constant 0 : i32
    %c0_i32_1 = arith.constant 0 : i32
    return %c0_i32, %c0_i32_0 : i32, i32
  }
  func.func @transform_8(%arg0: i32) -> (i32, i32) {
    %c0_i32 = arith.constant 0 : i32
    %c0_i32_0 = arith.constant 0 : i32
    %c0_i32_1 = arith.constant 0 : i32
    return %c0_i32, %c0_i32_0 : i32, i32
  }
  func.func @transform_9(%arg0: i32) -> (i32, i32, i32) {
    %c0_i32 = arith.constant 0 : i32
    %c0_i32_0 = arith.constant 0 : i32
    %c0_i32_1 = arith.constant 0 : i32
    return %arg0, %c0_i32, %c0_i32_0 : i32, i32, i32
  }
  func.func @transform_10(%arg0: i32) -> (i32, i32, i32) {
    %c0_i32 = arith.constant 0 : i32
    %c0_i32_0 = arith.constant 0 : i32
    %c0_i32_1 = arith.constant 0 : i32
    return %arg0, %c0_i32, %c0_i32_0 : i32, i32, i32
  }
}

</mosaic_0001>

<llo_original>
// kernel: local_pointnet_forward.1
$region0: #{local_pointnet_forward.1}
  #allocation0 [shape = 'u32[]', space=smem, size = 0x4, offset = 0x4, fixed_abs, tag = 'smem constant byte address 0x4 - core index']
  #allocation1 [shape = 'u32[144,128]{1,0:T(1,128)}', space=vmem, size = 0x12000, scoped, tag = 'internal scratch']
  #allocation2 [shape = 'f32[1,1]{1,0:T(1,128)S(1)}', space=vmem, size = 0x200, scoped, tag = 'scoped memory for local_pointnet_forward.1']
  %s0 = inlined_call_operand.hbm [shape: f32[2,16,31], index: 0, kind: input, shape index: {}]
  %s1 = inlined_call_operand.hbm [shape: f32[31,32], index: 1, kind: input, shape index: {}]
  %s2 = inlined_call_operand.vmem [shape: f32[1,32], index: 2, kind: input, shape index: {}]
  %s3 = inlined_call_operand.hbm [shape: f32[32,48], index: 3, kind: input, shape index: {}]
  %s4 = inlined_call_operand.vmem [shape: f32[1,48], index: 4, kind: input, shape index: {}]
  %s5 = inlined_call_operand.hbm [shape: f32[48,64], index: 5, kind: input, shape index: {}]
  %s6 = inlined_call_operand.vmem [shape: f32[1,64], index: 6, kind: input, shape index: {}]
  %s7 = inlined_call_operand.vmem [shape: f32[1,64], index: 7, kind: input, shape index: {}]
  %s8 = inlined_call_operand.<no memory space> [shape: f32[1,1], index: 8, kind: input, shape index: {}]
  %s9 = inlined_call_operand.hbm [shape: f32[2,1,64], index: 9, kind: output, shape index: {0}]
  %s10 = inlined_call_operand.vmem [shape: f32[2,16,1], index: 10, kind: output, shape index: {1}]
  %11 = xla_tuple %s9, %s10
  %s12 = sld [smem:[#allocation0]]
  $region93: #{local_pointnet_forward.1} parent=0
    _
  %s14 = ssub.s32 1, %s12
  %s15 = scalar_select 0, %s14, %s12
  %v16 = vstv %s8
  %17 = vst [vmem:[#allocation2] sm:$0x1] %v16
  $region1: #{local_pointnet_forward.1} parent=0
    #allocation3 [shape = 'u8[16384]{0}', space=vmem, size = 0x4000, scoped, tag = 'input window, operand 0']
    #allocation4 [shape = 's32[2]{0}', space=sflag, size = 0x8, scoped, tag = 'scoped memory for local_pointnet_forward.1']
    #allocation5 [shape = 's32[2]{0}', space=sflag, size = 0x8, scoped, tag = 'scoped memory for local_pointnet_forward.1']
    #allocation6 [shape = 'u8[16384]{0}', space=vmem, size = 0x4000, scoped, tag = 'input window, operand 1, single buffered']
    #allocation7 [shape = 's32[1]{0}', space=sflag, size = 0x4, scoped, tag = 'scoped memory for local_pointnet_forward.1']
    #allocation8 [shape = 'u8[16384]{0}', space=vmem, size = 0x4000, scoped, tag = 'input window, operand 3, single buffered']
    #allocation9 [shape = 'u8[24576]{0}', space=vmem, size = 0x6000, scoped, tag = 'input window, operand 5, single buffered']
    #allocation10 [shape = 's32[1]{0}', space=sflag, size = 0x4, scoped, tag = 'scoped memory for local_pointnet_forward.1']
    #allocation11 [shape = 'u8[1024]{0}', space=vmem, size = 0x400, scoped, tag = 'output window, operand 0']
    %18 = vsyncpa [#allocation4], 0
    %s19 = scalar_lea.sflag [#allocation4], 1
    %20 = vsyncpa %s19, 0
    %21 = vsyncpa [#allocation7], 0
    %22 = vsyncpa [#allocation10], 0
    %23 = vsyncpa [#allocation5], 0
    %s24 = scalar_lea.sflag [#allocation5], 1
    %25 = vsyncpa %s24, 0
    loop: start=0, step=1, limit=4
    $region2: #{local_pointnet_forward.1} parent=1 // loop_pre_header
      _
    $region3: #{local_pointnet_forward.1} parent=1 // loop_header
      %s27 = sphi 0, %s31
      %p28 = scmp.ge.s32.totalorder %s27, 4
      %s37 = sphi 0, %s39
      %s40 = sphi 0, %s37
      %s41 = sphi 0, %s40
      %s57 = sphi 0, %s41
      %s61 = sphi 0, %s61
      %s63 = sphi 0, %s61
      %s64 = sphi 0, %s63
      %s78 = sphi 0, %s64
      %s82 = sphi 0, %s82
      %s84 = sphi 0, %s82
      %s85 = sphi 0, %s84
      %s99 = sphi 0, %s85
      %s103 = sphi 0, %s103
      %s105 = sphi 0, %s103
      %s106 = sphi 0, %s105
      %s120 = sphi 0, %s106
      %s124 = sphi 0, %s124
      %s126 = sphi 0, %s124
      %s127 = sphi 0, %s126
      %s141 = sphi 0, %s127
      %s145 = sphi 0, %s145
      %s147 = sphi 0, %s145
      %s148 = sphi 0, %s147
      %s162 = sphi 0, %s148
      %s166 = sphi 0, %s166
      %s168 = sphi 0, %s166
      %s169 = sphi 0, %s168
      %s183 = sphi 0, %s169
      %s187 = sphi 0, %s187
      %s189 = sphi 0, %s187
      %s190 = sphi 0, %s189
      %s204 = sphi 0, %s190
      %s208 = sphi 0, %s208
      %s210 = sphi 0, %s208
      %s211 = sphi 0, %s210
      %s225 = sphi 0, %s211
      %s231 = sphi 0, %s233
      %s234 = sphi 0, %s231
      %s235 = sphi 0, %s234
      %s251 = sphi 0, %s235
      %s257 = sphi 0, %s259
      %s260 = sphi 0, %s257
      %s261 = sphi 0, %s260
      %s277 = sphi 0, %s261
    $region4: #{local_pointnet_forward.1} parent=1 // loop_header_branch
      %30 = sbr.rel (%p28) target = $region8
    $region5: #{local_pointnet_forward.1} parent=1 // loop_body
      %s32 = ssub.s32 %s27, 1
      %s33 = ssub.s32 %s27, 2
      %s34 = sadd.s32 %s27, 1
      %s35 = ssub.s32 %s27, %s34
      %p36 = scmp.eq.s32.totalorder %s35, 0
      %s38 = sadd.s32 %s37, 1
      %s39 = scalar_select %p36, %s37, %s38
      %p42 = pneg %p36
      %p43 = scmp.eq.s32.totalorder %s27, 1
      %p44 = por %p42, %p43
      %p45 = scmp.ne.s32.totalorder %s37, %s40
      %p46 = scmp.eq.s32.totalorder %s27, 0
      %p47 = por %p45, %p46
      %p48 = scmp.ne.s32.totalorder %s37, %s40
      %p49 = scmp.eq.s32.totalorder %s32, 1
      %p50 = por %p48, %p49
      %p51 = scmp.ne.s32.totalorder %s40, %s41
      %p52 = scmp.eq.s32.totalorder %s32, 0
      %p53 = por %p51, %p52
      %p54 = scmp.ne.s32.totalorder %s40, %s41
      %p55 = scmp.eq.s32.totalorder %s33, 1
      %p56 = por %p54, %p55
      %p58 = scmp.ne.s32.totalorder %s41, %s57
      %p59 = scmp.eq.s32.totalorder %s33, 0
      %p60 = por %p58, %p59
      %s62 = sadd.s32 %s61, 1
      %p65 = scmp.eq.s32.totalorder %s27, 1
      %p66 = scmp.ne.s32.totalorder %s61, %s63
      %p67 = scmp.eq.s32.totalorder %s27, 0
      %p68 = por %p66, %p67
      %p69 = scmp.ne.s32.totalorder %s61, %s63
      %p70 = scmp.eq.s32.totalorder %s32, 1
      %p71 = por %p69, %p70
      %p72 = scmp.ne.s32.totalorder %s63, %s64
      %p73 = scmp.eq.s32.totalorder %s32, 0
      %p74 = por %p72, %p73
      %p75 = scmp.ne.s32.totalorder %s63, %s64
      %p76 = scmp.eq.s32.totalorder %s33, 1
      %p77 = por %p75, %p76
      %p79 = scmp.ne.s32.totalorder %s64, %s78
      %p80 = scmp.eq.s32.totalorder %s33, 0
      %p81 = por %p79, %p80
      %s83 = sadd.s32 %s82, 1
      %p86 = scmp.eq.s32.totalorder %s27, 1
      %p87 = scmp.ne.s32.totalorder %s82, %s84
      %p88 = scmp.eq.s32.totalorder %s27, 0
      %p89 = por %p87, %p88
      %p90 = scmp.ne.s32.totalorder %s82, %s84
      %p91 = scmp.eq.s32.totalorder %s32, 1
      %p92 = por %p90, %p91
      %p93 = scmp.ne.s32.totalorder %s84, %s85
      %p94 = scmp.eq.s32.totalorder %s32, 0
      %p95 = por %p93, %p94
      %p96 = scmp.ne.s32.totalorder %s84, %s85
      %p97 = scmp.eq.s32.totalorder %s33, 1
      %p98 = por %p96, %p97
      %p100 = scmp.ne.s32.totalorder %s85, %s99
      %p101 = scmp.eq.s32.totalorder %s33, 0
      %p102 = por %p100, %p101
      %s104 = sadd.s32 %s103, 1
      %p107 = scmp.eq.s32.totalorder %s27, 1
      %p108 = scmp.ne.s32.totalorder %s103, %s105
      %p109 = scmp.eq.s32.totalorder %s27, 0
      %p110 = por %p108, %p109
      %p111 = scmp.ne.s32.totalorder %s103, %s105
      %p112 = scmp.eq.s32.totalorder %s32, 1
      %p113 = por %p111, %p112
      %p114 = scmp.ne.s32.totalorder %s105, %s106
      %p115 = scmp.eq.s32.totalorder %s32, 0
      %p116 = por %p114, %p115
      %p117 = scmp.ne.s32.totalorder %s105, %s106
      %p118 = scmp.eq.s32.totalorder %s33, 1
      %p119 = por %p117, %p118
      %p121 = scmp.ne.s32.totalorder %s106, %s120
      %p122 = scmp.eq.s32.totalorder %s33, 0
      %p123 = por %p121, %p122
      %s125 = sadd.s32 %s124, 1
      %p128 = scmp.eq.s32.totalorder %s27, 1
      %p129 = scmp.ne.s32.totalorder %s124, %s126
      %p130 = scmp.eq.s32.totalorder %s27, 0
      %p131 = por %p129, %p130
      %p132 = scmp.ne.s32.totalorder %s124, %s126
      %p133 = scmp.eq.s32.totalorder %s32, 1
      %p134 = por %p132, %p133
      %p135 = scmp.ne.s32.totalorder %s126, %s127
      %p136 = scmp.eq.s32.totalorder %s32, 0
      %p137 = por %p135, %p136
      %p138 = scmp.ne.s32.totalorder %s126, %s127
      %p139 = scmp.eq.s32.totalorder %s33, 1
      %p140 = por %p138, %p139
      %p142 = scmp.ne.s32.totalorder %s127, %s141
      %p143 = scmp.eq.s32.totalorder %s33, 0
      %p144 = por %p142, %p143
      %s146 = sadd.s32 %s145, 1
      %p149 = scmp.eq.s32.totalorder %s27, 1
      %p150 = scmp.ne.s32.totalorder %s145, %s147
      %p151 = scmp.eq.s32.totalorder %s27, 0
      %p152 = por %p150, %p151
      %p153 = scmp.ne.s32.totalorder %s145, %s147
      %p154 = scmp.eq.s32.totalorder %s32, 1
      %p155 = por %p153, %p154
      %p156 = scmp.ne.s32.totalorder %s147, %s148
      %p157 = scmp.eq.s32.totalorder %s32, 0
      %p158 = por %p156, %p157
      %p159 = scmp.ne.s32.totalorder %s147, %s148
      %p160 = scmp.eq.s32.totalorder %s33, 1
      %p161 = por %p159, %p160
      %p163 = scmp.ne.s32.totalorder %s148, %s162
      %p164 = scmp.eq.s32.totalorder %s33, 0
      %p165 = por %p163, %p164
      %s167 = sadd.s32 %s166, 1
      %p170 = scmp.eq.s32.totalorder %s27, 1
      %p171 = scmp.ne.s32.totalorder %s166, %s168
      %p172 = scmp.eq.s32.totalorder %s27, 0
      %p173 = por %p171, %p172
      %p174 = scmp.ne.s32.totalorder %s166, %s168
      %p175 = scmp.eq.s32.totalorder %s32, 1
      %p176 = por %p174, %p175
      %p177 = scmp.ne.s32.totalorder %s168, %s169
      %p178 = scmp.eq.s32.totalorder %s32, 0
      %p179 = por %p177, %p178
      %p180 = scmp.ne.s32.totalorder %s168, %s169
      %p181 = scmp.eq.s32.totalorder %s33, 1
      %p182 = por %p180, %p181
      %p184 = scmp.ne.s32.totalorder %s169, %s183
      %p185 = scmp.eq.s32.totalorder %s33, 0
      %p186 = por %p184, %p185
      %s188 = sadd.s32 %s187, 1
      %p191 = scmp.eq.s32.totalorder %s27, 1
      %p192 = scmp.ne.s32.totalorder %s187, %s189
      %p193 = scmp.eq.s32.totalorder %s27, 0
      %p194 = por %p192, %p193
      %p195 = scmp.ne.s32.totalorder %s187, %s189
      %p196 = scmp.eq.s32.totalorder %s32, 1
      %p197 = por %p195, %p196
      %p198 = scmp.ne.s32.totalorder %s189, %s190
      %p199 = scmp.eq.s32.totalorder %s32, 0
      %p200 = por %p198, %p199
      %p201 = scmp.ne.s32.totalorder %s189, %s190
      %p202 = scmp.eq.s32.totalorder %s33, 1
      %p203 = por %p201, %p202
      %p205 = scmp.ne.s32.totalorder %s190, %s204
      %p206 = scmp.eq.s32.totalorder %s33, 0
      %p207 = por %p205, %p206
      %s209 = sadd.s32 %s208, 1
      %p212 = scmp.eq.s32.totalorder %s27, 1
      %p213 = scmp.ne.s32.totalorder %s208, %s210
      %p214 = scmp.eq.s32.totalorder %s27, 0
      %p215 = por %p213, %p214
      %p216 = scmp.ne.s32.totalorder %s208, %s210
      %p217 = scmp.eq.s32.totalorder %s32, 1
      %p218 = por %p216, %p217
      %p219 = scmp.ne.s32.totalorder %s210, %s211
      %p220 = scmp.eq.s32.totalorder %s32, 0
      %p221 = por %p219, %p220
      %p222 = scmp.ne.s32.totalorder %s210, %s211
      %p223 = scmp.eq.s32.totalorder %s33, 1
      %p224 = por %p222, %p223
      %p226 = scmp.ne.s32.totalorder %s211, %s225
      %p227 = scmp.eq.s32.totalorder %s33, 0
      %p228 = por %p226, %p227
      %s229 = ssub.s32 %s27, %s34
      %p230 = scmp.eq.s32.totalorder %s229, 0
      %s232 = sadd.s32 %s231, 1
      %s233 = scalar_select %p230, %s231, %s232
      %p236 = pneg %p230
      %p237 = scmp.eq.s32.totalorder %s27, 1
      %p238 = por %p236, %p237
      %p239 = scmp.ne.s32.totalorder %s231, %s234
      %p240 = scmp.eq.s32.totalorder %s27, 0
      %p241 = por %p239, %p240
      %p242 = scmp.ne.s32.totalorder %s231, %s234
      %p243 = scmp.eq.s32.totalorder %s32, 1
      %p244 = por %p242, %p243
      %p245 = scmp.ne.s32.totalorder %s234, %s235
      %p246 = scmp.eq.s32.totalorder %s32, 0
      %p247 = por %p245, %p246
      %p248 = scmp.ne.s32.totalorder %s234, %s235
      %p249 = scmp.eq.s32.totalorder %s33, 1
      %p250 = por %p248, %p249
      %p252 = scmp.ne.s32.totalorder %s235, %s251
      %p253 = scmp.eq.s32.totalorder %s33, 0
      %p254 = por %p252, %p253
      %s255 = ssub.s32 %s27, %s34
      %p256 = scmp.eq.s32.totalorder %s255, 0
      %s258 = sadd.s32 %s257, 1
      %s259 = scalar_select %p256, %s257, %s258
      %p262 = pneg %p256
      %p263 = scmp.eq.s32.totalorder %s27, 1
      %p264 = por %p262, %p263
      %p265 = scmp.ne.s32.totalorder %s257, %s260
      %p266 = scmp.eq.s32.totalorder %s27, 0
      %p267 = por %p265, %p266
      %p268 = scmp.ne.s32.totalorder %s257, %s260
      %p269 = scmp.eq.s32.totalorder %s32, 1
      %p270 = por %p268, %p269
      %p271 = scmp.ne.s32.totalorder %s260, %s261
      %p272 = scmp.eq.s32.totalorder %s32, 0
      %p273 = por %p271, %p272
      %p274 = scmp.ne.s32.totalorder %s260, %s261
      %p275 = scmp.eq.s32.totalorder %s33, 1
      %p276 = por %p274, %p275
      %p278 = scmp.ne.s32.totalorder %s261, %s277
      %p279 = scmp.eq.s32.totalorder %s33, 0
      %p280 = por %p278, %p279
      %p281 = scmp.le.s32.totalorder 1, %s27
      %p282 = scmp.lt.s32.totalorder %s27, 3
      %p283 = pnand %p281, %p282
      %p284 = pneg %p283
      // Predicated region
      $region9: #{local_pointnet_forward.1} parent=5 // pred_check
        _
      $region10: #{local_pointnet_forward.1} parent=5 // pred_check_branch
        %286 = sbr.rel (%p283) target = $region12
      $region11: #{local_pointnet_forward.1} parent=5 // pred_region
        %s287 = ssub.s32 %s27, 1
        // Predicated region
        $region13: #{local_pointnet_forward.1} parent=11 // pred_check
          %p288 = pneg %p74
        $region14: #{local_pointnet_forward.1} parent=11 // pred_check_branch
          %290 = sbr.rel (%p288) target = $region16
        $region15: #{local_pointnet_forward.1} parent=11 // pred_region
          %s292 = ssub.s32 512, 512
          %293 = vsyncadd [#allocation7], %s292
          %s294 = sshll.u32 [#allocation6], 4
          %s295 = int_to_ptr.vmem [resolvable:$true] %s294
          %300 = dma.hbm_to_vmem [thread:$0]  %s1, 512, %s295, [#allocation7], 128, 128, 8
        $region16: #{local_pointnet_forward.1} parent=11 // pred_fallthru
          _
        // Predicated region
        $region17: #{local_pointnet_forward.1} parent=11 // pred_check
          %p301 = pneg %p95
        $region18: #{local_pointnet_forward.1} parent=11 // pred_check_branch
          %303 = sbr.rel (%p301) target = $region20
        $region19: #{local_pointnet_forward.1} parent=11 // pred_region
          _
        $region20: #{local_pointnet_forward.1} parent=11 // pred_fallthru
          _
        // Predicated region
        $region21: #{local_pointnet_forward.1} parent=11 // pred_check
          %p304 = pneg %p116
        $region22: #{local_pointnet_forward.1} parent=11 // pred_check_branch
          %306 = sbr.rel (%p304) target = $region24
        $region23: #{local_pointnet_forward.1} parent=11 // pred_region
          %s308 = ssub.s32 512, 512
          %309 = vsyncadd [#allocation7], %s308
          %s310 = sshll.u32 [#allocation8], 4
          %s311 = int_to_ptr.vmem [resolvable:$true] %s310
          %316 = dma.hbm_to_vmem [thread:$0]  %s3, 512, %s311, [#allocation7], 128, 128, 8
        $region24: #{local_pointnet_forward.1} parent=11 // pred_fallthru
          _
        // Predicated region
        $region25: #{local_pointnet_forward.1} parent=11 // pred_check
          %p317 = pneg %p137
        $region26: #{local_pointnet_forward.1} parent=11 // pred_check_branch
          %319 = sbr.rel (%p317) target = $region28
        $region27: #{local_pointnet_forward.1} parent=11 // pred_region
          _
        $region28: #{local_pointnet_forward.1} parent=11 // pred_fallthru
          _
        // Predicated region
        $region29: #{local_pointnet_forward.1} parent=11 // pred_check
          %p320 = pneg %p158
        $region30: #{local_pointnet_forward.1} parent=11 // pred_check_branch
          %322 = sbr.rel (%p320) target = $region32
        $region31: #{local_pointnet_forward.1} parent=11 // pred_region
          %s324 = ssub.s32 768, 768
          %325 = vsyncadd [#allocation10], %s324
          %s326 = sshll.u32 [#allocation9], 4
          %s327 = int_to_ptr.vmem [resolvable:$true] %s326
          %332 = dma.hbm_to_vmem [thread:$0]  %s5, 768, %s327, [#allocation10], 128, 128, 8
        $region32: #{local_pointnet_forward.1} parent=11 // pred_fallthru
          _
        // Predicated region
        $region33: #{local_pointnet_forward.1} parent=11 // pred_check
          %p333 = pneg %p179
        $region34: #{local_pointnet_forward.1} parent=11 // pred_check_branch
          %335 = sbr.rel (%p333) target = $region36
        $region35: #{local_pointnet_forward.1} parent=11 // pred_region
          _
        $region36: #{local_pointnet_forward.1} parent=11 // pred_fallthru
          _
        // Predicated region
        $region37: #{local_pointnet_forward.1} parent=11 // pred_check
          %p336 = pneg %p200
        $region38: #{local_pointnet_forward.1} parent=11 // pred_check_branch
          %338 = sbr.rel (%p336) target = $region40
        $region39: #{local_pointnet_forward.1} parent=11 // pred_region
          _
        $region40: #{local_pointnet_forward.1} parent=11 // pred_fallthru
          _
        // Predicated region
        $region41: #{local_pointnet_forward.1} parent=11 // pred_check
          %p339 = pneg %p221
        $region42: #{local_pointnet_forward.1} parent=11 // pred_check_branch
          %341 = sbr.rel (%p339) target = $region44
        $region43: #{local_pointnet_forward.1} parent=11 // pred_region
          _
        $region44: #{local_pointnet_forward.1} parent=11 // pred_fallthru
          _
      $region12: #{local_pointnet_forward.1} parent=5 // pred_fallthru
        _
      %p342 = scmp.lt.s32.totalorder %s27, 2
      // Predicated region
      $region45: #{local_pointnet_forward.1} parent=5 // pred_check
        %p343 = pneg %p342
      $region46: #{local_pointnet_forward.1} parent=5 // pred_check_branch
        %345 = sbr.rel (%p343) target = $region48
      $region47: #{local_pointnet_forward.1} parent=5 // pred_region
        // Predicated region
        $region49: #{local_pointnet_forward.1} parent=47 // pred_check
          %p346 = pneg %p47
        $region50: #{local_pointnet_forward.1} parent=47 // pred_check_branch
          %348 = sbr.rel (%p346) target = $region52
        $region51: #{local_pointnet_forward.1} parent=47 // pred_region
          %s349 = sand.u32 %s37, 1
          %s350 = scalar_lea.sflag [#allocation4], %s349
          %s351 = sand.u32 %s37, 1
          %s352 = smul.addr %s351, 16
          %s353 = scalar_lea.vmem [#allocation3], %s352
          %s355 = ssub.s32 256, 256
          %356 = vsyncadd %s350, %s355
          %s357 = smul.addr %s27, 2
          %s358 = smul.addr %s357, 128
          %s359 = scalar_lea.hbm %s0, %s358
          %s360 = sshll.u32 %s353, 4
          %s361 = int_to_ptr.vmem [resolvable:$true] %s360
          %366 = dma.hbm_to_vmem [thread:$0]  %s359, 256, %s361, %s350, 128, 128, 8
        $region52: #{local_pointnet_forward.1} parent=47 // pred_fallthru
          _
      $region48: #{local_pointnet_forward.1} parent=5 // pred_fallthru
        _
      %p367 = scmp.le.s32.totalorder 1, %s27
      %p368 = scmp.lt.s32.totalorder %s27, 3
      %p369 = pnand %p367, %p368
      %p370 = pneg %p369
      // Predicated region
      $region53: #{local_pointnet_forward.1} parent=5 // pred_check
        _
      $region54: #{local_pointnet_forward.1} parent=5 // pred_check_branch
        %372 = sbr.rel (%p369) target = $region56
      $region55: #{local_pointnet_forward.1} parent=5 // pred_region
        %s373 = ssub.s32 %s27, 1
        %s374 = sand.u32 %s40, 1
        %s375 = scalar_lea.sflag [#allocation4], %s374
        %s376 = sand.u32 %s40, 1
        %s377 = smul.addr %s376, 16
        %s378 = scalar_lea.vmem [#allocation3], %s377
        // Predicated region
        $region57: #{local_pointnet_forward.1} parent=55 // pred_check
          %p379 = pneg %p53
        $region58: #{local_pointnet_forward.1} parent=55 // pred_check_branch
          %381 = sbr.rel (%p379) target = $region60
        $region59: #{local_pointnet_forward.1} parent=55 // pred_region
          %382 = dma.done %s375, 256
        $region60: #{local_pointnet_forward.1} parent=55 // pred_fallthru
          _
        // Predicated region
        $region61: #{local_pointnet_forward.1} parent=55 // pred_check
          %p383 = pneg %p74
        $region62: #{local_pointnet_forward.1} parent=55 // pred_check_branch
          %385 = sbr.rel (%p383) target = $region64
        $region63: #{local_pointnet_forward.1} parent=55 // pred_region
          %386 = dma.done [#allocation7], 512
        $region64: #{local_pointnet_forward.1} parent=55 // pred_fallthru
          _
        // Predicated region
        $region65: #{local_pointnet_forward.1} parent=55 // pred_check
          %p387 = pneg %p116
        $region66: #{local_pointnet_forward.1} parent=55 // pred_check_branch
          %389 = sbr.rel (%p387) target = $region68
        $region67: #{local_pointnet_forward.1} parent=55 // pred_region
          %390 = dma.done [#allocation7], 512
        $region68: #{local_pointnet_forward.1} parent=55 // pred_fallthru
          _
        // Predicated region
        $region69: #{local_pointnet_forward.1} parent=55 // pred_check
          %p391 = pneg %p158
        $region70: #{local_pointnet_forward.1} parent=55 // pred_check_branch
          %393 = sbr.rel (%p391) target = $region72
        $region71: #{local_pointnet_forward.1} parent=55 // pred_region
          %394 = dma.done [#allocation10], 768
        $region72: #{local_pointnet_forward.1} parent=55 // pred_fallthru
          _
        %s395 = sand.u32 %s40, 1
        %s396 = scalar_lea.sflag [#allocation4], %s395
        %s397 = sand.u32 %s40, 1
        %s398 = smul.addr %s397, 16
        %s399 = scalar_lea.vmem [#allocation3], %s398
        %p400 = pneg %p53
        %p401 = pneg %p50
        %p402 = pneg %p74
        %p403 = pneg %p71
        %p404 = pneg %p95
        %p405 = pneg %p92
        %p406 = pneg %p116
        %p407 = pneg %p113
        %p408 = pneg %p137
        %p409 = pneg %p134
        %p410 = pneg %p158
        %p411 = pneg %p155
        %p412 = pneg %p179
        %p413 = pneg %p176
        %p414 = pneg %p200
        %p415 = pneg %p197
        %p416 = pneg %p221
        %p417 = pneg %p218
        %p418 = pneg %p247
        %p419 = pneg %p244
        %s420 = sand.u32 %s234, 1
        %s421 = scalar_lea.sflag [#allocation5], %s420
        %s422 = sand.u32 %s234, 1
        %s423 = scalar_lea.vmem [#allocation11], %s422
        %p424 = pneg %p273
        %p425 = pneg %p270
        %p426 = scmp.lt.s32.totalorder %s32, 1
        %s427 = scalar_select %p426, %s32, 1
        %s428 = smul.addr %s427, 2
        %s429 = smul.addr %s428, 8
        %s430 = scalar_lea.vmem %s10, %s429
        %p431 = scmp.lt.s32.totalorder %s32, 1
        %s432 = scalar_select %p431, %s32, 1
        %s433 = smul.addr %s432, 2
        %s434 = smul.addr %s433, 8
        %s435 = scalar_lea.vmem %s10, %s434
        %v436 = vld [vmem:[%s378] sm:$0xff]
        %v437 = vld [vmem:[%s378 + $0x8] sm:$0xff]
        %v438 = vld [vmem:[#allocation6] sm:$0xff]
        %v439 = vld [vmem:[#allocation6 + $0x8] sm:$0xff]
        %v440 = vld [vmem:[#allocation6 + $0x10] sm:$0xff]
        %v441 = vld [vmem:[#allocation6 + $0x18] sm:$0x7f]
        %v442 = vld [vmem:[%s2] sm:$0x1]
        %v444 = vlaneseq
        %v445 = vshrl.u32 %v444, 7
        %v446 = vsub.s32 0, %v445
        %v447 = vrot.slane %v442, %v446
        %vm449 = vcmask 252928
        %v451 = vsel %vm449, %v436, 0
        %v454 = vsel %vm449, %v437, 0
        %vm456 = vcmask 1046528
        %v458 = vsel %vm456, %v441, 0
        %460 = vmatprep.subr.mxu0 0.0
        %461 = vmatpush1.msra.mxu0 %v438
        %462 = vmatprep.subr.mxu0 0.0
        %463 = vmatpush1.msra.mxu0 %v439
        %464 = vmatprep.subr.mxu0 0.0
        %465 = vmatpush1.msra.mxu0 %v440
        %466 = vmatprep.subr.mxu0 0.0
        %467 = vmatpush1.msra.mxu0 %v458
        %468 = vmatprep.subr.mxu0 0.0
        %469 = vmatpush1.msra.mxu0 0.0
        %470 = vmatprep.subr.mxu0 0.0
        %471 = vmatpush1.msra.mxu0 0.0
        %472 = vmatprep.subr.mxu0 0.0
        %473 = vmatpush1.msra.mxu0 0.0
        %474 = vmatprep.subr.mxu0 0.0
        %475 = vmatpush1.msra.mxu0 0.0
        %476 = vmatprep.subr.mxu0 0.0
        %477 = vmatpush1.msra.mxu0 0.0
        %478 = vmatprep.subr.mxu0 0.0
        %479 = vmatpush1.msra.mxu0 0.0
        %480 = vmatprep.subr.mxu0 0.0
        %481 = vmatpush1.msra.mxu0 0.0
        %482 = vmatprep.subr.mxu0 0.0
        %483 = vmatpush1.msra.mxu0 0.0
        %484 = vmatprep.subr.mxu0 0.0
        %485 = vmatpush1.msra.mxu0 0.0
        %486 = vmatprep.subr.mxu0 0.0
        %487 = vmatpush1.msra.mxu0 0.0
        %488 = vmatprep.subr.mxu0 0.0
        %489 = vmatpush1.msra.mxu0 0.0
        %490 = vmatprep.subr.mxu0 0.0
        %491 = vmatpush1.msra.mxu0 0.0
        %492 = vmatprep.subr.mxu0 0.0
        %493 = vmatpush1.msra.mxu0 0.0
        %494 = vmatprep.subr.mxu0 0.0
        %495 = vmatpush1.msra.mxu0 0.0
        %496 = vmatprep.subr.mxu0 0.0
        %497 = vmatpush1.msra.mxu0 0.0
        %498 = vmatprep.subr.mxu0 0.0
        %499 = vmatpush1.msra.mxu0 0.0
        %500 = vmatprep.subr.mxu0 0.0
        %501 = vmatpush1.msra.mxu0 0.0
        %502 = vmatprep.subr.mxu0 0.0
        %503 = vmatpush1.msra.mxu0 0.0
        %504 = vmatprep.subr.mxu0 0.0
        %505 = vmatpush1.msra.mxu0 0.0
        %506 = vmatprep.subr.mxu0 0.0
        %507 = vmatpush1.msra.mxu0 0.0
        %508 = vmatprep.subr.mxu0 0.0
        %509 = vmatpush1.msra.mxu0 0.0
        %510 = vmatprep.subr.mxu0 0.0
        %511 = vmatpush1.msra.mxu0 0.0
        %512 = vmatprep.subr.mxu0 0.0
        %513 = vmatpush1.msra.mxu0 0.0
        %514 = vmatprep.subr.mxu0 0.0
        %515 = vmatpush1.msra.mxu0 0.0
        %516 = vmatprep.subr.mxu0 0.0
        %517 = vmatpush1.msra.mxu0 0.0
        %518 = vmatprep.subr.mxu0 0.0
        %519 = vmatpush1.msra.mxu0 0.0
        %520 = vmatprep.subr.mxu0 0.0
        %521 = vmatpush1.msra.mxu0 0.0
        %522 = vmatprep.subr.mxu0 0.0
        %523 = vmatpush1.msra.mxu0 0.0
        %524 = vmatprep.mubr.f32.mxu0 0.0
        %525 = vmatmul.mubr.f32.gmra.mrb[0].mxu0 %v451
        %v526 = vpop.f32.mrb[0].mxu0
        %v527 = vadd.f32 %v447, %v526
        %v528 = vpop.f32.mrb[0].mxu0
        %529 = vmatprep.mubr.f32.mxu0 0.0
        %530 = vmatmul.mubr.f32.gmra.mrb[0].mxu0 %v454
        %v531 = vpop.f32.mrb[0].mxu0
        %v532 = vadd.f32 %v447, %v531
        %v533 = vpop.f32.mrb[0].mxu0
        %534 = vdwg.mxu0
        %v535 = vmax.f32 %v527, 0.0
        %v536 = vmax.f32 %v532, 0.0
        %v537 = vld [vmem:[#allocation8] sm:$0xff]
        %v538 = vld [vmem:[#allocation8 + $0x8] sm:$0xff]
        %v539 = vld [vmem:[#allocation8 + $0x10] sm:$0xff]
        %v540 = vld [vmem:[#allocation8 + $0x18] sm:$0xff]
        %v541 = vld [vmem:[%s4] sm:$0x1]
        %v543 = vlaneseq
        %v544 = vshrl.u32 %v543, 7
        %v545 = vsub.s32 0, %v544
        %v546 = vrot.slane %v541, %v545
        %vm548 = vcmask 261120
        %v550 = vsel %vm548, %v535, 0
        %v553 = vsel %vm548, %v536, 0
        %555 = vmatprep.subr.mxu0 0.0
        %556 = vmatpush1.msra.mxu0 %v537
        %557 = vmatprep.subr.mxu0 0.0
        %558 = vmatpush1.msra.mxu0 %v538
        %559 = vmatprep.subr.mxu0 0.0
        %560 = vmatpush1.msra.mxu0 %v539
        %561 = vmatprep.subr.mxu0 0.0
        %562 = vmatpush1.msra.mxu0 %v540
        %563 = vmatprep.subr.mxu0 0.0
        %564 = vmatpush1.msra.mxu0 0.0
        %565 = vmatprep.subr.mxu0 0.0
        %566 = vmatpush1.msra.mxu0 0.0
        %567 = vmatprep.subr.mxu0 0.0
        %568 = vmatpush1.msra.mxu0 0.0
        %569 = vmatprep.subr.mxu0 0.0
        %570 = vmatpush1.msra.mxu0 0.0
        %571 = vmatprep.subr.mxu0 0.0
        %572 = vmatpush1.msra.mxu0 0.0
        %573 = vmatprep.subr.mxu0 0.0
        %574 = vmatpush1.msra.mxu0 0.0
        %575 = vmatprep.subr.mxu0 0.0
        %576 = vmatpush1.msra.mxu0 0.0
        %577 = vmatprep.subr.mxu0 0.0
        %578 = vmatpush1.msra.mxu0 0.0
        %579 = vmatprep.subr.mxu0 0.0
        %580 = vmatpush1.msra.mxu0 0.0
        %581 = vmatprep.subr.mxu0 0.0
        %582 = vmatpush1.msra.mxu0 0.0
        %583 = vmatprep.subr.mxu0 0.0
        %584 = vmatpush1.msra.mxu0 0.0
        %585 = vmatprep.subr.mxu0 0.0
        %586 = vmatpush1.msra.mxu0 0.0
        %587 = vmatprep.subr.mxu0 0.0
        %588 = vmatpush1.msra.mxu0 0.0
        %589 = vmatprep.subr.mxu0 0.0
        %590 = vmatpush1.msra.mxu0 0.0
        %591 = vmatprep.subr.mxu0 0.0
        %592 = vmatpush1.msra.mxu0 0.0
        %593 = vmatprep.subr.mxu0 0.0
        %594 = vmatpush1.msra.mxu0 0.0
        %595 = vmatprep.subr.mxu0 0.0
        %596 = vmatpush1.msra.mxu0 0.0
        %597 = vmatprep.subr.mxu0 0.0
        %598 = vmatpush1.msra.mxu0 0.0
        %599 = vmatprep.subr.mxu0 0.0
        %600 = vmatpush1.msra.mxu0 0.0
        %601 = vmatprep.subr.mxu0 0.0
        %602 = vmatpush1.msra.mxu0 0.0
        %603 = vmatprep.subr.mxu0 0.0
        %604 = vmatpush1.msra.mxu0 0.0
        %605 = vmatprep.subr.mxu0 0.0
        %606 = vmatpush1.msra.mxu0 0.0
        %607 = vmatprep.subr.mxu0 0.0
        %608 = vmatpush1.msra.mxu0 0.0
        %609 = vmatprep.subr.mxu0 0.0
        %610 = vmatpush1.msra.mxu0 0.0
        %611 = vmatprep.subr.mxu0 0.0
        %612 = vmatpush1.msra.mxu0 0.0
        %613 = vmatprep.subr.mxu0 0.0
        %614 = vmatpush1.msra.mxu0 0.0
        %615 = vmatprep.subr.mxu0 0.0
        %616 = vmatpush1.msra.mxu0 0.0
        %617 = vmatprep.subr.mxu0 0.0
        %618 = vmatpush1.msra.mxu0 0.0
        %619 = vmatprep.mubr.f32.mxu0 0.0
        %620 = vmatmul.mubr.f32.gmra.mrb[0].mxu0 %v550
        %v621 = vpop.f32.mrb[0].mxu0
        %v622 = vadd.f32 %v546, %v621
        %v623 = vpop.f32.mrb[0].mxu0
        %624 = vmatprep.mubr.f32.mxu0 0.0
        %625 = vmatmul.mubr.f32.gmra.mrb[0].mxu0 %v553
        %v626 = vpop.f32.mrb[0].mxu0
        %v627 = vadd.f32 %v546, %v626
        %v628 = vpop.f32.mrb[0].mxu0
        %629 = vdwg.mxu0
        %v630 = vmax.f32 %v622, 0.0
        %v631 = vmax.f32 %v627, 0.0
        %v632 = vld [vmem:[#allocation9] sm:$0xff]
        %v633 = vld [vmem:[#allocation9 + $0x8] sm:$0xff]
        %v634 = vld [vmem:[#allocation9 + $0x10] sm:$0xff]
        %v635 = vld [vmem:[#allocation9 + $0x18] sm:$0xff]
        %v636 = vld [vmem:[#allocation9 + $0x20] sm:$0xff]
        %v637 = vld [vmem:[#allocation9 + $0x28] sm:$0xff]
        %v638 = vld [vmem:[%s6] sm:$0x1]
        %v640 = vlaneseq
        %v641 = vshrl.u32 %v640, 7
        %v642 = vsub.s32 0, %v641
        %v643 = vrot.slane %v638, %v642
        %vm645 = vcmask 392192
        %v647 = vsel %vm645, %v630, 0
        %v650 = vsel %vm645, %v631, 0
        %652 = vmatprep.subr.mxu0 0.0
        %653 = vmatpush1.msra.mxu0 %v632
        %654 = vmatprep.subr.mxu0 0.0
        %655 = vmatpush1.msra.mxu0 %v633
        %656 = vmatprep.subr.mxu0 0.0
        %657 = vmatpush1.msra.mxu0 %v634
        %658 = vmatprep.subr.mxu0 0.0
        %659 = vmatpush1.msra.mxu0 %v635
        %660 = vmatprep.subr.mxu0 0.0
        %661 = vmatpush1.msra.mxu0 %v636
        %662 = vmatprep.subr.mxu0 0.0
        %663 = vmatpush1.msra.mxu0 %v637
        %664 = vmatprep.subr.mxu0 0.0
        %665 = vmatpush1.msra.mxu0 0.0
        %666 = vmatprep.subr.mxu0 0.0
        %667 = vmatpush1.msra.mxu0 0.0
        %668 = vmatprep.subr.mxu0 0.0
        %669 = vmatpush1.msra.mxu0 0.0
        %670 = vmatprep.subr.mxu0 0.0
        %671 = vmatpush1.msra.mxu0 0.0
        %672 = vmatprep.subr.mxu0 0.0
        %673 = vmatpush1.msra.mxu0 0.0
        %674 = vmatprep.subr.mxu0 0.0
        %675 = vmatpush1.msra.mxu0 0.0
        %676 = vmatprep.subr.mxu0 0.0
        %677 = vmatpush1.msra.mxu0 0.0
        %678 = vmatprep.subr.mxu0 0.0
        %679 = vmatpush1.msra.mxu0 0.0
        %680 = vmatprep.subr.mxu0 0.0
        %681 = vmatpush1.msra.mxu0 0.0
        %682 = vmatprep.subr.mxu0 0.0
        %683 = vmatpush1.msra.mxu0 0.0
        %684 = vmatprep.subr.mxu0 0.0
        %685 = vmatpush1.msra.mxu0 0.0
        %686 = vmatprep.subr.mxu0 0.0
        %687 = vmatpush1.msra.mxu0 0.0
        %688 = vmatprep.subr.mxu0 0.0
        %689 = vmatpush1.msra.mxu0 0.0
        %690 = vmatprep.subr.mxu0 0.0
        %691 = vmatpush1.msra.mxu0 0.0
        %692 = vmatprep.subr.mxu0 0.0
        %693 = vmatpush1.msra.mxu0 0.0
        %694 = vmatprep.subr.mxu0 0.0
        %695 = vmatpush1.msra.mxu0 0.0
        %696 = vmatprep.subr.mxu0 0.0
        %697 = vmatpush1.msra.mxu0 0.0
        %698 = vmatprep.subr.mxu0 0.0
        %699 = vmatpush1.msra.mxu0 0.0
        %700 = vmatprep.subr.mxu0 0.0
        %701 = vmatpush1.msra.mxu0 0.0
        %702 = vmatprep.subr.mxu0 0.0
        %703 = vmatpush1.msra.mxu0 0.0
        %704 = vmatprep.subr.mxu0 0.0
        %705 = vmatpush1.msra.mxu0 0.0
        %706 = vmatprep.subr.mxu0 0.0
        %707 = vmatpush1.msra.mxu0 0.0
        %708 = vmatprep.subr.mxu0 0.0
        %709 = vmatpush1.msra.mxu0 0.0
        %710 = vmatprep.subr.mxu0 0.0
        %711 = vmatpush1.msra.mxu0 0.0
        %712 = vmatprep.subr.mxu0 0.0
        %713 = vmatpush1.msra.mxu0 0.0
        %714 = vmatprep.subr.mxu0 0.0
        %715 = vmatpush1.msra.mxu0 0.0
        %716 = vmatprep.mubr.f32.mxu0 0.0
        %717 = vmatmul.mubr.f32.gmra.mrb[0].mxu0 %v647
        %v718 = vpop.f32.mrb[0].mxu0
        %v719 = vadd.f32 %v643, %v718
        %v720 = vpop.f32.mrb[0].mxu0
        %721 = vmatprep.mubr.f32.mxu0 0.0
        %722 = vmatmul.mubr.f32.gmra.mrb[0].mxu0 %v650
        %v723 = vpop.f32.mrb[0].mxu0
        %v724 = vadd.f32 %v643, %v723
        %v725 = vpop.f32.mrb[0].mxu0
        %726 = vdwg.mxu0
        %v727 = vmax.f32 %v719, 0.0
        %v728 = vmax.f32 %v724, 0.0
        %v729 = vld [vmem:[%s7] sm:$0x1]
        %v731 = vlaneseq
        %v732 = vshrl.u32 %v731, 7
        %v733 = vsub.s32 0, %v732
        %v734 = vrot.slane %v729, %v733
        %v736 = vmul.f32 %v727, %v734
        %v737 = vmul.f32 %v728, %v734
        %vm738 = vcmask 523264
        %v739 = vsel %vm738, %v736, 0.0
        %740 = vadd.xlane.f32.xlu0 %v739
        %v741 = vpop.xlane.xlu0 %740
        %v742 = vsel %vm738, %v737, 0.0
        %743 = vadd.xlane.f32.xlu0 %v742
        %v744 = vpop.xlane.xlu0 %743
        %v745 = vld [vmem:[#allocation2] sm:$0x1]
        %v747 = vlaneseq
        %v748 = vshrl.u32 %v747, 7
        %v749 = vsub.s32 0, %v748
        %v750 = vrot.slane %v745, %v749
        %v752 = vadd.f32 %v741, %v750
        %v753 = vadd.f32 %v744, %v750
        %vm754 = vcmask 7168
        %v755 = vsel %vm754, %v752, -inf
        %v756 = vsel %vm754, %v753, -inf
        %v757 = vmax.f32 %v755, %v756
        %v758 = vrot.slane %v757, 4
        %v759 = vmax.f32 %v757, %v758
        %v760 = vrot.slane %v759, 2
        %v761 = vmax.f32 %v759, %v760
        %v762 = vrot.slane %v761, 1
        %v763 = vmax.f32 %v761, %v762
        %v764 = vsub.f32 %v752, %v763
        %v765 = vsub.f32 %v753, %v763
        %v766 = vmul.f32 %v764, 1.442695
        %v767 = vpow.pop %v766
        %v768 = vmul.f32 %v765, 1.442695
        %v769 = vpow.pop %v768
        %v770 = vsel %vm754, %v767, 0.0
        %v771 = vsel %vm754, %v769, 0.0
        %v772 = vadd.f32 %v770, %v771
        %v773 = vrot.slane %v772, 4
        %v774 = vadd.f32 %v772, %v773
        %v775 = vrot.slane %v774, 2
        %v776 = vadd.f32 %v774, %v775
        %v777 = vrot.slane %v776, 1
        %v778 = vadd.f32 %v776, %v777
        %v779 = vrcp.pop %v778
        %v780 = vmul.f32 %v767, %v779
        %v781 = vmul.f32 %v769, %v779
        %783 = vset.pattern.permute.xlu0 0
        %784 = vperm.xlu0 %783, %v780
        %v785 = vpop.permute.xlu0 %784
        %788 = vset.pattern.permute.xlu0 0
        %789 = vperm.xlu0 %788, %v781
        %v790 = vpop.permute.xlu0 %789
        %v792 = vmul.f32 %v727, %v785
        %v793 = vmul.f32 %v728, %v790
        %v794 = vsel %vm738, %v792, 0.0
        %v795 = vsel %vm738, %v793, 0.0
        %v796 = vadd.f32 %v794, %v795
        %v797 = vrot.slane %v796, 4
        %v798 = vadd.f32 %v796, %v797
        %v799 = vrot.slane %v798, 2
        %v800 = vadd.f32 %v798, %v799
        %v801 = vrot.slane %v800, 1
        %v802 = vadd.f32 %v800, %v801
        %vm803 = vcmask 516096
        %804 = vst.msk [vmem:[%s423] sm:$0x1] %vm803, %v802
        %805 = vst.msk [vmem:[%s435] sm:$0xff] %vm754, %v780
        %806 = vst.msk [vmem:[%s435 + $0x8] sm:$0xff] %vm754, %v781
        %s807 = sand.u32 %s234, 1
        %s808 = scalar_lea.sflag [#allocation5], %s807
        %s809 = sand.u32 %s234, 1
        %s810 = scalar_lea.vmem [#allocation11], %s809
        %p811 = scmp.lt.s32.totalorder %s32, 1
        %s812 = scalar_select %p811, %s32, 1
        %s813 = smul.addr %s812, 2
        %s814 = smul.addr %s813, 8
        %s815 = scalar_lea.vmem %s10, %s814
        // Predicated region
        $region73: #{local_pointnet_forward.1} parent=55 // pred_check
          %p816 = pneg %p244
        $region74: #{local_pointnet_forward.1} parent=55 // pred_check_branch
          %818 = sbr.rel (%p816) target = $region76
        $region75: #{local_pointnet_forward.1} parent=55 // pred_region
          %s820 = ssub.s32 16, 16
          %821 = vsyncadd %s808, %s820
          %s822 = smul.addr %s32, 16
          %s823 = scalar_lea.hbm %s9, %s822
          %s825 = sshll.u32 %s810, 4
          %s826 = int_to_ptr.vmem [resolvable:$true] %s825
          %828 = dma.vmem_to_hbm [thread:$0]  %s826, 16, %s823, %s808
        $region76: #{local_pointnet_forward.1} parent=55 // pred_fallthru
          _
        // Predicated region
        $region77: #{local_pointnet_forward.1} parent=55 // pred_check
          %p829 = pneg %p270
        $region78: #{local_pointnet_forward.1} parent=55 // pred_check_branch
          %831 = sbr.rel (%p829) target = $region80
        $region79: #{local_pointnet_forward.1} parent=55 // pred_region
          _
        $region80: #{local_pointnet_forward.1} parent=55 // pred_fallthru
          _
      $region56: #{local_pointnet_forward.1} parent=5 // pred_fallthru
        _
      %p832 = scmp.le.s32.totalorder 2, %s27
      // Predicated region
      $region81: #{local_pointnet_forward.1} parent=5 // pred_check
        %p833 = pneg %p832
      $region82: #{local_pointnet_forward.1} parent=5 // pred_check_branch
        %835 = sbr.rel (%p833) target = $region84
      $region83: #{local_pointnet_forward.1} parent=5 // pred_region
        %s836 = ssub.s32 %s27, 2
        // Predicated region
        $region85: #{local_pointnet_forward.1} parent=83 // pred_check
          %p837 = pneg %p250
        $region86: #{local_pointnet_forward.1} parent=83 // pred_check_branch
          %839 = sbr.rel (%p837) target = $region88
        $region87: #{local_pointnet_forward.1} parent=83 // pred_region
          %s840 = sand.u32 %s235, 1
          %s841 = scalar_lea.sflag [#allocation5], %s840
          %s842 = sand.u32 %s235, 1
          %s843 = scalar_lea.vmem [#allocation11], %s842
          %844 = dma.done %s841, 16
        $region88: #{local_pointnet_forward.1} parent=83 // pred_fallthru
          _
        // Predicated region
        $region89: #{local_pointnet_forward.1} parent=83 // pred_check
          %p845 = pneg %p276
        $region90: #{local_pointnet_forward.1} parent=83 // pred_check_branch
          %847 = sbr.rel (%p845) target = $region92
        $region91: #{local_pointnet_forward.1} parent=83 // pred_region
          %p848 = scmp.lt.s32.totalorder %s33, 1
          %s849 = scalar_select %p848, %s33, 1
          %s850 = smul.addr %s849, 2
          %s851 = smul.addr %s850, 8
          %s852 = scalar_lea.vmem %s10, %s851
        $region92: #{local_pointnet_forward.1} parent=83 // pred_fallthru
          _
      $region84: #{local_pointnet_forward.1} parent=5 // pred_fallthru
        _
    $region6: #{local_pointnet_forward.1} parent=1 // loop_footer
      %s31 = sadd.s32 1, %s27
    $region7: #{local_pointnet_forward.1} parent=1 // loop_footer_branch
      %26 = sbr.rel target = $region3
    $region8: #{local_pointnet_forward.1} parent=1 // loop_exit
      _
    %853 = vsyncpa [#allocation4], 1
    %s854 = scalar_lea.sflag [#allocation4], 1
    %855 = vsyncpa %s854, 1
    %856 = vsyncpa [#allocation7], 1
    %857 = vsyncpa [#allocation10], 1
    %858 = vsyncpa [#allocation5], 1
    %s859 = scalar_lea.sflag [#allocation5], 1
    %860 = vsyncpa %s859, 1

</llo_original>
